<compile_context>
chip_gen: v5e
topology: v5e:2x2
jax: 0.10.0
libtpu: 0.0.40
codegen_flags: <defaults>
</compile_context>

<pallas_src>
import jax
import jax.numpy as jnp
from jax.experimental import pallas as pl
from jax.experimental.pallas import tpu as pltpu


def _patch_embed_kernel(p_ref, w_ref, b_ref, pos_ref, out_ref):
    # p_ref:   (TM, LP*Dp)    packed, zero-padded patch rows for this M tile
    # w_ref:   (LP*Dp, LP*E)  block-diagonal projection weight (resident)
    # b_ref:   (1, LP*E)      projection bias, tiled LP times across lanes
    # pos_ref: (TM, LP*E)     positional-embedding rows matching this M tile
    # out_ref: (TM, LP*E)     lane-dense output tile
    proj = jnp.dot(p_ref[...], w_ref[...],
                   preferred_element_type=jnp.float32)     # MXU, f32 accumulate
    out_ref[...] = (proj + b_ref[...] + pos_ref[...]).astype(out_ref.dtype)


def patch_embedding(x, conv_w, conv_b, cls_token, pos_embedding, patch_size,
                    *, use_bf16_matmul=False):
    """x: (B, C, H, W) float32. Returns (B, (H//P)*(W//P) + 1, E) float32."""
    B, C, H, W = x.shape
    P = patch_size
    E = conv_w.shape[0]
    nh, nw = H // P, W // P
    N = nh * nw
    D = C * P * P

    # ---- glue: extract non-overlapping patches, channel-major (matches conv) ----
    # (B, C, nh, P, nw, P) -> (B, nh, nw, C, P, P) -> (B*N, D)
    patches = x.reshape(B, C, nh, P, nw, P).transpose(0, 2, 4, 1, 3, 5)
    patches = patches.reshape(B * N, D)

    # ---- pad contraction dim to a lane-aligned multiple of 128 (done once) ----
    Dp = pl.cdiv(D, 128) * 128
    patches = jnp.pad(patches, ((0, 0), (0, Dp - D)))

    # conv weight (E, C, P, P) -> (D, E) -> zero-pad rows to (Dp, E)
    w = conv_w.reshape(E, D).T
    w = jnp.pad(w, ((0, Dp - D), (0, 0)))

    # ---- lane packing: LP consecutive tokens share one 128-lane output row ----
    if E < 128 and 128 % E == 0:
        LP = 128 // E
        while LP > 1 and N % LP != 0:   # fall back to a packing that divides N
            LP //= 2
    else:
        LP = 1
    M = B * N
    M2 = M // LP

    patches_p = patches.reshape(M2, LP * Dp)          # pair consecutive rows (free)
    w_blk = jnp.zeros((LP * Dp, LP * E), dtype=w.dtype)
    for k in range(LP):
        w_blk = w_blk.at[k * Dp:(k + 1) * Dp, k * E:(k + 1) * E].set(w)
    b_p = jnp.tile(conv_b.reshape(1, E), (1, LP))     # (1, LP*E)

    pos_patch = pos_embedding[1:].reshape(N // LP, LP * E)   # per-batch token rows
    pos_tiled = jnp.tile(pos_patch, (B, 1))                  # (M2, LP*E)

    if use_bf16_matmul:
        # bf16 MXU operands; accumulation and all element-wise adds remain f32.
        patches_p = patches_p.astype(jnp.bfloat16)
        w_blk = w_blk.astype(jnp.bfloat16)

    # ---- M tiling: single grid step when small, 256-row tiles otherwise.
    # Always pad the packed-row count to a multiple of 8 (sublane alignment). ----
    M2a = pl.cdiv(M2, 8) * 8
    TM = M2a if M2a <= 512 else 256
    M2p = pl.cdiv(M2a, TM) * TM
    if M2p != M2:
        patches_p = jnp.pad(patches_p, ((0, M2p - M2), (0, 0)))
        pos_tiled = jnp.pad(pos_tiled, ((0, M2p - M2), (0, 0)))

    out_p = pl.pallas_call(
        _patch_embed_kernel,
        out_shape=jax.ShapeDtypeStruct((M2p, LP * E), jnp.float32),
        grid_spec=pltpu.PrefetchScalarGridSpec(
            num_scalar_prefetch=0,
            grid=(M2p // TM,),
            in_specs=[
                pl.BlockSpec((TM, LP * Dp), lambda i: (i, 0)),     # patches tile
                pl.BlockSpec((LP * Dp, LP * E), lambda i: (0, 0)), # weight (resident)
                pl.BlockSpec((1, LP * E), lambda i: (0, 0)),       # bias (resident)
                pl.BlockSpec((TM, LP * E), lambda i: (i, 0)),      # pos rows
            ],
            out_specs=pl.BlockSpec((TM, LP * E), lambda i: (i, 0)),
        ),
        compiler_params=pltpu.CompilerParams(
            dimension_semantics=("parallel",)),
    )(patches_p, w_blk, b_p, pos_tiled)

    # unpack lanes -> tokens: (M2, LP*E) row-major is exactly (B, N, E)
    proj = out_p[:M2].reshape(B, N, E)

    # cls row is batch-invariant: cls + pos[0]; broadcast + concat in wrapper.
    cls_row = cls_token.reshape(1, E) + pos_embedding[0:1, :]
    cls_rows = jnp.broadcast_to(cls_row[None], (B, 1, E))
    return jnp.concatenate([cls_rows, proj], axis=1)


def reference(x, conv_w, conv_b, cls_token, pos_embedding, patch_size):
    """Pure-JAX reference reproducing the PyTorch forward."""
    B, C, H, W = x.shape
    P = patch_size
    E = conv_w.shape[0]
    nh, nw = H // P, W // P
    patches = x.reshape(B, C, nh, P, nw, P).transpose(0, 2, 4, 1, 3, 5)
    patches = patches.reshape(B, nh * nw, C * P * P)
    proj = patches @ conv_w.reshape(E, -1).T + conv_b            # (B, N, E)
    cls = jnp.broadcast_to(cls_token.reshape(1, 1, E), (B, 1, E))
    return jnp.concatenate([cls, proj], axis=1) + pos_embedding[None]


if __name__ == "__main__":
    # Module defaults: in_channels=1, patch_size=7, emb_size=64, img_size=28
    B, C, H, W = 2, 1, 28, 28
    P, E = 7, 64
    N = (H // P) * (W // P)  # 16

    key = jax.random.PRNGKey(0)
    kx, kw, kb, kc, kp = jax.random.split(key, 5)
    x = jax.random.normal(kx, (B, C, H, W), dtype=jnp.float32)
    conv_w = jax.random.normal(kw, (E, C, P, P), dtype=jnp.float32) * 0.05
    conv_b = jax.random.normal(kb, (E,), dtype=jnp.float32) * 0.05
    cls_token = jax.random.normal(kc, (1, 1, E), dtype=jnp.float32)
    pos_embedding = jax.random.normal(kp, (N + 1, E), dtype=jnp.float32)

    ref = reference(x, conv_w, conv_b, cls_token, pos_embedding, P)

    # f32 path: strict check against the reference.
    out = patch_embedding(x, conv_w, conv_b, cls_token, pos_embedding, P)
    out = jax.block_until_ready(out)
    assert out.shape == (B, N + 1, E), out.shape
    assert jnp.allclose(out, ref, atol=1e-4, rtol=1e-4), "f32 mismatch vs reference"

    # bf16-operand path (v6e/v7x MXU fast path); loose tolerance for operand rounding.
    out_bf16 = patch_embedding(x, conv_w, conv_b, cls_token, pos_embedding, P,
                               use_bf16_matmul=True)
    out_bf16 = jax.block_until_ready(out_bf16)
    assert jnp.allclose(out_bf16, ref, atol=5e-2, rtol=5e-2), "bf16 mismatch vs reference"

    print("KERNEL_OK")
</pallas_src>

<mosaic_0001>
module attributes {stable_mosaic.version = 11 : i64} {
  func.func @_patch_embed_kernel(%arg0: i32, %arg1: memref<16x256xf32, #tpu.memory_space<vmem>>, %arg2: memref<256x128xf32, #tpu.memory_space<vmem>>, %arg3: memref<1x128xf32, #tpu.memory_space<vmem>>, %arg4: memref<16x128xf32, #tpu.memory_space<vmem>>, %arg5: memref<16x128xf32, #tpu.memory_space<vmem>>) attributes {dimension_semantics = [#tpu.dimension_semantics<parallel>], iteration_bounds = array<i64: 1>, scalar_prefetch = 0 : i64, scratch_operands = 0 : i64, tpu.core_type = #tpu.core_type<tc>, window_params = [{transform_indices = @transform_0, window_bounds = array<i64: 16, 256>}, {pipeline_mode = #tpu.pipeline_mode<synchronous>, transform_indices = @transform_1, window_bounds = array<i64: 256, 128>}, {pipeline_mode = #tpu.pipeline_mode<synchronous>, transform_indices = @transform_2, window_bounds = array<i64: 1, 128>}, {transform_indices = @transform_3, window_bounds = array<i64: 16, 128>}, {transform_indices = @transform_4, window_bounds = array<i64: 16, 128>}]} {
    %c0 = arith.constant 0 : index
    %c0_0 = arith.constant 0 : index
    %0 = vector.load %arg1[%c0, %c0_0] : memref<16x256xf32, #tpu.memory_space<vmem>>, vector<16x256xf32>
    %c0_1 = arith.constant 0 : index
    %c0_2 = arith.constant 0 : index
    %1 = vector.load %arg2[%c0_1, %c0_2] : memref<256x128xf32, #tpu.memory_space<vmem>>, vector<256x128xf32>
    %cst = arith.constant dense<0.000000e+00> : vector<16x128xf32>
    %2 = tpu.matmul %0, %1, %cst {dimension_numbers = #tpu.dot_dimension_numbers<[1], [0], [0], [1], [0, 0, 1, 1], [], []>} : vector<16x256xf32>, vector<256x128xf32>, vector<16x128xf32> -> vector<16x128xf32>
    %c0_3 = arith.constant 0 : index
    %c0_4 = arith.constant 0 : index
    %3 = vector.load %arg3[%c0_3, %c0_4] : memref<1x128xf32, #tpu.memory_space<vmem>>, vector<1x128xf32>
    %4 = vector.broadcast %3 : vector<1x128xf32> to vector<16x128xf32>
    %5 = arith.addf %2, %4 : vector<16x128xf32>
    %c0_5 = arith.constant 0 : index
    %c0_6 = arith.constant 0 : index
    %6 = vector.load %arg4[%c0_5, %c0_6] : memref<16x128xf32, #tpu.memory_space<vmem>>, vector<16x128xf32>
    %7 = arith.addf %5, %6 : vector<16x128xf32>
    %c0_7 = arith.constant 0 : index
    %c0_8 = arith.constant 0 : index
    %8 = vector.load %arg5[%c0_7, %c0_8] : memref<16x128xf32, #tpu.memory_space<vmem>>, vector<16x128xf32>
    tpu.vector_store %arg5[%c0_7, %c0_8], %7 {strides = array<i32>} : memref<16x128xf32, #tpu.memory_space<vmem>>, vector<16x128xf32>,
    return
  }
  func.func @transform_0(%arg0: i32) -> (i32, i32) {
    %c0_i32 = arith.constant 0 : i32
    %c0_i32_0 = arith.constant 0 : i32
    return %arg0, %c0_i32 : i32, i32
  }
  func.func @transform_1(%arg0: i32) -> (i32, i32) {
    %c0_i32 = arith.constant 0 : i32
    %c0_i32_0 = arith.constant 0 : i32
    %c0_i32_1 = arith.constant 0 : i32
    return %c0_i32, %c0_i32_0 : i32, i32
  }
  func.func @transform_2(%arg0: i32) -> (i32, i32) {
    %c0_i32 = arith.constant 0 : i32
    %c0_i32_0 = arith.constant 0 : i32
    %c0_i32_1 = arith.constant 0 : i32
    return %c0_i32, %c0_i32_0 : i32, i32
  }
  func.func @transform_3(%arg0: i32) -> (i32, i32) {
    %c0_i32 = arith.constant 0 : i32
    %c0_i32_0 = arith.constant 0 : i32
    return %arg0, %c0_i32 : i32, i32
  }
  func.func @transform_4(%arg0: i32) -> (i32, i32) {
    %c0_i32 = arith.constant 0 : i32
    %c0_i32_0 = arith.constant 0 : i32
    return %arg0, %c0_i32 : i32, i32
  }
}

</mosaic_0001>

<llo_original>
// kernel: tpu_custom_call.1
$region0: #{tpu_custom_call.1}
  #allocation0 [shape = 'u32[]', space=smem, size = 0x4, offset = 0x4, fixed_abs, tag = 'smem constant byte address 0x4 - core index']
  #allocation1 [shape = 'u32[72,128]{1,0:T(1,128)}', space=vmem, size = 0x9000, scoped, tag = 'internal scratch']
  %s0 = inlined_call_operand.hbm [shape: f32[16,256], index: 0, kind: input, shape index: {}]
  %s1 = inlined_call_operand.hbm [shape: f32[256,128], index: 1, kind: input, shape index: {}]
  %s2 = inlined_call_operand.vmem [shape: f32[1,128], index: 2, kind: input, shape index: {}]
  %s3 = inlined_call_operand.hbm [shape: f32[16,128], index: 3, kind: input, shape index: {}]
  %s4 = inlined_call_operand.hbm [shape: f32[16,128], index: 4, kind: output, shape index: {}]
  %s5 = sld [smem:[#allocation0]]
  $region38: #{tpu_custom_call.1} parent=0
    _
  %s7 = ssub.s32 1, %s5
  %s8 = scalar_select 0, %s7, %s5
  $region1: #{tpu_custom_call.1} parent=0
    #allocation2 [shape = 'u8[16384]{0}', space=vmem, size = 0x4000, scoped, tag = 'input window, operand 0, single buffered']
    #allocation3 [shape = 's32[1]{0}', space=sflag, size = 0x4, scoped, tag = 'scoped memory for tpu_custom_call.1']
    #allocation4 [shape = 's32[1]{0}', space=sflag, size = 0x4, scoped, tag = 'scoped memory for tpu_custom_call.1']
    #allocation5 [shape = 'u8[131072]{0}', space=vmem, size = 0x20000, scoped, tag = 'input window, operand 1, single buffered']
    #allocation6 [shape = 's32[1]{0}', space=sflag, size = 0x4, scoped, tag = 'scoped memory for tpu_custom_call.1']
    #allocation7 [shape = 'u8[8192]{0}', space=vmem, size = 0x2000, scoped, tag = 'input window, operand 3, single buffered']
    #allocation8 [shape = 'u8[8192]{0}', space=vmem, size = 0x2000, scoped, tag = 'output window, operand 0, single buffered']
    %9 = vsyncpa [#allocation3], 0
    %10 = vsyncpa [#allocation6], 0
    %11 = vsyncpa [#allocation4], 0
    // Predicated region
    $region2: #{tpu_custom_call.1} parent=1 // pred_check
      _
    $region3: #{tpu_custom_call.1} parent=1 // pred_check_branch
      %13 = sbr.rel (0) target = $region5
    $region4: #{tpu_custom_call.1} parent=1 // pred_region
      %15 = vsyncadd [#allocation3], 0
      %s16 = sshll.u32 %s0, 4
      %s17 = int_to_ptr.hbm [resolvable:$true] %s16
      %s18 = sshll.u32 [#allocation2], 4
      %s19 = int_to_ptr.vmem [resolvable:$true] %s18
      %24 = dma.hbm_to_vmem [thread:$0]  %s17, 512, %s19, [#allocation3], 256, 256, 16
    $region5: #{tpu_custom_call.1} parent=1 // pred_fallthru
      _
    // Predicated region
    $region6: #{tpu_custom_call.1} parent=1 // pred_check
      _
    $region7: #{tpu_custom_call.1} parent=1 // pred_check_branch
      %26 = sbr.rel (0) target = $region9
    $region8: #{tpu_custom_call.1} parent=1 // pred_region
      %28 = vsyncadd [#allocation6], 0
      %s29 = sshll.u32 %s1, 4
      %s30 = int_to_ptr.hbm [resolvable:$true] %s29
      %s31 = sshll.u32 [#allocation5], 4
      %s32 = int_to_ptr.vmem [resolvable:$true] %s31
      %37 = dma.hbm_to_vmem [thread:$0]  %s30, 4096, %s32, [#allocation6], 128, 128, 8
    $region9: #{tpu_custom_call.1} parent=1 // pred_fallthru
      _
    // Predicated region
    $region10: #{tpu_custom_call.1} parent=1 // pred_check
      _
    $region11: #{tpu_custom_call.1} parent=1 // pred_check_branch
      %39 = sbr.rel (0) target = $region13
    $region12: #{tpu_custom_call.1} parent=1 // pred_region
      _
    $region13: #{tpu_custom_call.1} parent=1 // pred_fallthru
      _
    // Predicated region
    $region14: #{tpu_custom_call.1} parent=1 // pred_check
      _
    $region15: #{tpu_custom_call.1} parent=1 // pred_check_branch
      %41 = sbr.rel (0) target = $region17
    $region16: #{tpu_custom_call.1} parent=1 // pred_region
      %43 = vsyncadd [#allocation6], 0
      %s44 = sshll.u32 %s3, 4
      %s45 = int_to_ptr.hbm [resolvable:$true] %s44
      %s46 = sshll.u32 [#allocation7], 4
      %s47 = int_to_ptr.vmem [resolvable:$true] %s46
      %52 = dma.hbm_to_vmem [thread:$0]  %s45, 256, %s47, [#allocation6], 128, 128, 8
    $region17: #{tpu_custom_call.1} parent=1 // pred_fallthru
      _
    // Predicated region
    $region18: #{tpu_custom_call.1} parent=1 // pred_check
      _
    $region19: #{tpu_custom_call.1} parent=1 // pred_check_branch
      %54 = sbr.rel (0) target = $region21
    $region20: #{tpu_custom_call.1} parent=1 // pred_region
      %56 = dma.done [#allocation3], 512
    $region21: #{tpu_custom_call.1} parent=1 // pred_fallthru
      _
    // Predicated region
    $region22: #{tpu_custom_call.1} parent=1 // pred_check
      _
    $region23: #{tpu_custom_call.1} parent=1 // pred_check_branch
      %58 = sbr.rel (0) target = $region25
    $region24: #{tpu_custom_call.1} parent=1 // pred_region
      %60 = dma.done [#allocation6], 4096
    $region25: #{tpu_custom_call.1} parent=1 // pred_fallthru
      _
    // Predicated region
    $region26: #{tpu_custom_call.1} parent=1 // pred_check
      _
    $region27: #{tpu_custom_call.1} parent=1 // pred_check_branch
      %62 = sbr.rel (0) target = $region29
    $region28: #{tpu_custom_call.1} parent=1 // pred_region
      %64 = dma.done [#allocation6], 256
    $region29: #{tpu_custom_call.1} parent=1 // pred_fallthru
      _
    %v65 = vld [vmem:[#allocation2] sm:$0xff]
    %v66 = vld [vmem:[#allocation2 + $0x8] sm:$0xff]
    %v67 = vld [vmem:[#allocation2 + $0x10] sm:$0xff]
    %v68 = vld [vmem:[#allocation2 + $0x18] sm:$0xff]
    %v69 = vld [vmem:[#allocation5] sm:$0xff]
    %v70 = vld [vmem:[#allocation5 + $0x8] sm:$0xff]
    %v71 = vld [vmem:[#allocation5 + $0x10] sm:$0xff]
    %v72 = vld [vmem:[#allocation5 + $0x18] sm:$0xff]
    %v73 = vld [vmem:[#allocation5 + $0x20] sm:$0xff]
    %v74 = vld [vmem:[#allocation5 + $0x28] sm:$0xff]
    %v75 = vld [vmem:[#allocation5 + $0x30] sm:$0xff]
    %v76 = vld [vmem:[#allocation5 + $0x38] sm:$0xff]
    %v77 = vld [vmem:[#allocation5 + $0x40] sm:$0xff]
    %v78 = vld [vmem:[#allocation5 + $0x48] sm:$0xff]
    %v79 = vld [vmem:[#allocation5 + $0x50] sm:$0xff]
    %v80 = vld [vmem:[#allocation5 + $0x58] sm:$0xff]
    %v81 = vld [vmem:[#allocation5 + $0x60] sm:$0xff]
    %v82 = vld [vmem:[#allocation5 + $0x68] sm:$0xff]
    %v83 = vld [vmem:[#allocation5 + $0x70] sm:$0xff]
    %v84 = vld [vmem:[#allocation5 + $0x78] sm:$0xff]
    %v85 = vld [vmem:[#allocation5 + $0x80] sm:$0xff]
    %v86 = vld [vmem:[#allocation5 + $0x88] sm:$0xff]
    %v87 = vld [vmem:[#allocation5 + $0x90] sm:$0xff]
    %v88 = vld [vmem:[#allocation5 + $0x98] sm:$0xff]
    %v89 = vld [vmem:[#allocation5 + $0xa0] sm:$0xff]
    %v90 = vld [vmem:[#allocation5 + $0xa8] sm:$0xff]
    %v91 = vld [vmem:[#allocation5 + $0xb0] sm:$0xff]
    %v92 = vld [vmem:[#allocation5 + $0xb8] sm:$0xff]
    %v93 = vld [vmem:[#allocation5 + $0xc0] sm:$0xff]
    %v94 = vld [vmem:[#allocation5 + $0xc8] sm:$0xff]
    %v95 = vld [vmem:[#allocation5 + $0xd0] sm:$0xff]
    %v96 = vld [vmem:[#allocation5 + $0xd8] sm:$0xff]
    %v97 = vld [vmem:[#allocation5 + $0xe0] sm:$0xff]
    %v98 = vld [vmem:[#allocation5 + $0xe8] sm:$0xff]
    %v99 = vld [vmem:[#allocation5 + $0xf0] sm:$0xff]
    %v100 = vld [vmem:[#allocation5 + $0xf8] sm:$0xff]
    %v101 = vld [vmem:[%s2] sm:$0x1]
    %v103 = vperm.slane %v101, 0
    %105 = vmatpush.msra.mxu0 %v84
    %106 = vmatpush.msra.mxu0 %v83
    %107 = vmatpush.msra.mxu0 %v82
    %108 = vmatpush.msra.mxu0 %v81
    %109 = vmatpush.msra.mxu0 %v80
    %110 = vmatpush.msra.mxu0 %v79
    %111 = vmatpush.msra.mxu0 %v78
    %112 = vmatpush.msra.mxu0 %v77
    %113 = vmatpush.msra.mxu0 %v76
    %114 = vmatpush.msra.mxu0 %v75
    %115 = vmatpush.msra.mxu0 %v74
    %116 = vmatpush.msra.mxu0 %v73
    %117 = vmatpush.msra.mxu0 %v72
    %118 = vmatpush.msra.mxu0 %v71
    %119 = vmatpush.msra.mxu0 %v70
    %120 = vmatpush.msra.mxu0 %v69
    %121 = vmatmul.f32.gmra.mxu0 %v65
    %v122 = vpop.f32.mrf.mxu0
    %v123 = vadd.f32 %v103, %v122
    %124 = vmatmul.f32.gmra.mxu0 %v67
    %v125 = vpop.f32.mrf.mxu0
    %v126 = vadd.f32 %v103, %v125
    %127 = vdwg.mxu0
    %128 = vmatpush.msra.mxu0 %v100
    %129 = vmatpush.msra.mxu0 %v99
    %130 = vmatpush.msra.mxu0 %v98
    %131 = vmatpush.msra.mxu0 %v97
    %132 = vmatpush.msra.mxu0 %v96
    %133 = vmatpush.msra.mxu0 %v95
    %134 = vmatpush.msra.mxu0 %v94
    %135 = vmatpush.msra.mxu0 %v93
    %136 = vmatpush.msra.mxu0 %v92
    %137 = vmatpush.msra.mxu0 %v91
    %138 = vmatpush.msra.mxu0 %v90
    %139 = vmatpush.msra.mxu0 %v89
    %140 = vmatpush.msra.mxu0 %v88
    %141 = vmatpush.msra.mxu0 %v87
    %142 = vmatpush.msra.mxu0 %v86
    %143 = vmatpush.msra.mxu0 %v85
    %144 = vmatmul.f32.gmra.mxu0 %v66
    %v145 = vpop.f32.mrf.mxu0
    %v146 = vadd.f32 %v123, %v145
    %147 = vmatmul.f32.gmra.mxu0 %v68
    %v148 = vpop.f32.mrf.mxu0
    %v149 = vadd.f32 %v126, %v148
    %150 = vdwg.mxu0
    %v151 = vld [vmem:[#allocation7] sm:$0xff]
    %v152 = vld [vmem:[#allocation7 + $0x8] sm:$0xff]
    %v153 = vadd.f32 %v146, %v151
    %v154 = vadd.f32 %v149, %v152
    %155 = vst [vmem:[#allocation8] sm:$0xff] %v153
    %156 = vst [vmem:[#allocation8 + $0x8] sm:$0xff] %v154
    // Predicated region
    $region30: #{tpu_custom_call.1} parent=1 // pred_check
      _
    $region31: #{tpu_custom_call.1} parent=1 // pred_check_branch
      %158 = sbr.rel (0) target = $region33
    $region32: #{tpu_custom_call.1} parent=1 // pred_region
      %160 = vsyncadd [#allocation4], 0
      %s161 = sshll.u32 [#allocation8], 4
      %s162 = int_to_ptr.vmem [resolvable:$true] %s161
      %s163 = sshll.u32 %s4, 4
      %s164 = int_to_ptr.hbm [resolvable:$true] %s163
      %169 = dma.vmem_to_hbm [thread:$0]  %s162, 256, %s164, [#allocation4], 128, 128, 8
    $region33: #{tpu_custom_call.1} parent=1 // pred_fallthru
      _
    // Predicated region
    $region34: #{tpu_custom_call.1} parent=1 // pred_check
      _
    $region35: #{tpu_custom_call.1} parent=1 // pred_check_branch
      %171 = sbr.rel (0) target = $region37
    $region36: #{tpu_custom_call.1} parent=1 // pred_region
      %173 = dma.done [#allocation4], 256
    $region37: #{tpu_custom_call.1} parent=1 // pred_fallthru
      _
    %174 = vsyncpa [#allocation3], 1
    %175 = vsyncpa [#allocation6], 1
    %176 = vsyncpa [#allocation4], 1

</llo_original>
